<compile_context>
chip_gen: v6e
topology: v6e:2x2x1
jax: 0.10.0
libtpu: 0.0.40
codegen_flags: <defaults>
</compile_context>

<pallas_src>
import jax
import jax.numpy as jnp
from jax.experimental import pallas as pl
from jax.experimental.pallas import tpu as pltpu


def _round_up(x, m):
    return ((x + m - 1) // m) * m


def conv2d_same(x, weight, bias, kernel_size, *, compute_dtype=jnp.bfloat16):
    """Conv2dSame forward: ReflectionPad2d((ka,kb,ka,kb)) + Conv2d(stride=1).

    x: (N, C_in, H, W) NCHW.  weight: (C_out, C_in, K, K).  bias: (C_out,).
    Returns (N, C_out, H, W) in x.dtype.  compute_dtype=jnp.float32 is the
    precision escape hatch for large C_in*K*K.
    """
    N, c_in, H, W = x.shape
    c_out = weight.shape[0]
    K = kernel_size
    ka = K // 2
    kb = ka - 1 if K % 2 == 0 else ka

    # ReflectionPad2d (and jnp reflect pad) require pad width < spatial dim.
    assert max(ka, kb) < H and max(ka, kb) < W, "reflection pad wider than input"

    Hp = H + ka + kb
    Wp = W + ka + kb

    # ---- wrapper-side layout glue (cheap, no K^2 inflation) -----------------
    x_pad = jnp.pad(x, ((0, 0), (0, 0), (ka, kb), (ka, kb)), mode="reflect")
    x_pad = x_pad.astype(compute_dtype)

    seg_out = _round_up(H * Wp, 128)              # lane-dense wide-output width
    max_shift = (K - 1) * Wp + (K - 1)            # largest tap shift
    seg_in = _round_up(seg_out + max_shift, 128)  # per-image flat input length

    x_flat = x_pad.reshape(N, c_in, Hp * Wp)
    x_flat = jnp.pad(x_flat, ((0, 0), (0, 0), (0, seg_in - Hp * Wp)))

    # Weight -> (C_out, K*K*C_in), tap-major / channel-minor column order
    # (matches the in-kernel patch-row order); bias folded in as a column that
    # multiplies a ones-row of the patch matrix; zero-pad columns to CKKp.
    ckk = K * K * c_in
    ckk1 = ckk + 1
    ckkp = _round_up(ckk1, 16)        # bf16 packs 16 sublanes per vreg group
    w_perm = jnp.transpose(weight, (0, 2, 3, 1)).reshape(c_out, ckk)
    w_aug = jnp.concatenate([w_perm, bias.reshape(c_out, 1)], axis=1)
    w_aug = jnp.pad(w_aug, ((0, 0), (0, ckkp - ckk1))).astype(compute_dtype)

    # ---- kernel --------------------------------------------------------------
    def kernel(w_ref, x_ref, o_ref, p_ref):
        # w_ref: (C_out, ckkp)   bf16, same block every step -> resident
        # x_ref: (C_in, seg_in)  bf16, one image's flattened padded input
        # o_ref: (C_out, seg_out) wide (lane-padded) output for this image
        # p_ref: (ckkp, seg_out)  VMEM scratch patch tile (im2col built here)
        t = 0
        for kh in range(K):
            for kw in range(K):
                s = kh * Wp + kw      # static lane shift for this tap
                p_ref[pl.ds(t * c_in, c_in), :] = x_ref[:, pl.ds(s, seg_out)]
                t += 1
        # Row `ckk` carries the bias (ones * bias column); rows beyond hit
        # zero weight columns, so ones there are harmless.  Written every step
        # (NOT pl.when(step==0)): with megacore grid splitting, each core owns
        # a private scratch that must be initialized.
        p_ref[pl.ds(ckk, ckkp - ckk), :] = jnp.ones(
            (ckkp - ckk, seg_out), dtype=compute_dtype)
        acc = jnp.dot(w_ref[...], p_ref[...],
                      preferred_element_type=jnp.float32)
        o_ref[...] = acc.astype(o_ref.dtype)

    # TODO(synk): when C_in/H/W grow so one wide image per step no longer fits
    # the per-gen VMEM budget (v7x: 64 MiB physical), tile the lane axis with a
    # (K-1)*Wp halo (dynamic pl.ds base) and/or add a trailing "arbitrary"
    # contraction grid axis (tk~128 on v5e, ~256 on v6e/v7x) with an f32 VMEM
    # accumulator; optionally emit bf16/fp8 output on v7x.
    out_wide = pl.pallas_call(
        kernel,
        out_shape=jax.ShapeDtypeStruct((N, c_out, seg_out), x.dtype),
        grid_spec=pltpu.PrefetchScalarGridSpec(
            num_scalar_prefetch=0,
            grid=(N,),
            in_specs=[
                pl.BlockSpec((c_out, ckkp), lambda n: (0, 0)),
                pl.BlockSpec((None, c_in, seg_in), lambda n: (n, 0, 0)),
            ],
            out_specs=pl.BlockSpec((None, c_out, seg_out), lambda n: (n, 0, 0)),
            scratch_shapes=[pltpu.VMEM((ckkp, seg_out), compute_dtype)],
        ),
        compiler_params=pltpu.CompilerParams(
            dimension_semantics=("parallel",),
            vmem_limit_bytes=32 * 1024 * 1024),
    )(w_aug, x_flat)

    # Drop lane padding and the garbage "wide" columns.
    out = out_wide[:, :, :H * Wp].reshape(N, c_out, H, Wp)[:, :, :, :W]
    return out


def _reference_conv2d_same(x, weight, bias, kernel_size,
                           compute_dtype=jnp.bfloat16):
    # Same bf16-operand / f32-accumulation precision as the kernel.
    K = kernel_size
    ka = K // 2
    kb = ka - 1 if K % 2 == 0 else ka
    x_pad = jnp.pad(x, ((0, 0), (0, 0), (ka, kb), (ka, kb)), mode="reflect")
    out = jax.lax.conv_general_dilated(
        x_pad.astype(compute_dtype), weight.astype(compute_dtype),
        window_strides=(1, 1), padding="VALID",
        dimension_numbers=("NCHW", "OIHW", "NCHW"),
        preferred_element_type=jnp.float32)
    out = out + bias.astype(compute_dtype).astype(jnp.float32)[None, :, None, None]
    return out.astype(x.dtype)


if __name__ == "__main__":
    # Conv2dSame(in_channels=4, out_channels=8, kernel_size=3) on (2, 4, 16, 16).
    N, C_IN, C_OUT, H, W, K = 2, 4, 8, 16, 16, 3

    key = jax.random.PRNGKey(0)
    kx, kw_, kb_ = jax.random.split(key, 3)

    x = jax.random.normal(kx, (N, C_IN, H, W), dtype=jnp.float32)
    # Deterministic parameter init (mimics PyTorch's uniform fan-in init).
    fan_in = C_IN * K * K
    bound = 1.0 / (fan_in ** 0.5)
    weight = jax.random.uniform(kw_, (C_OUT, C_IN, K, K), jnp.float32,
                                minval=-bound, maxval=bound)
    bias = jax.random.uniform(kb_, (C_OUT,), jnp.float32,
                              minval=-bound, maxval=bound)

    out = conv2d_same(x, weight, bias, K)
    out = jax.block_until_ready(out)

    ref = _reference_conv2d_same(x, weight, bias, K)
    assert out.shape == (N, C_OUT, H, W)
    assert jnp.allclose(out, ref, atol=2e-3, rtol=2e-3), (
        float(jnp.max(jnp.abs(out - ref))))

    print("KERNEL_OK")
</pallas_src>

<mosaic_0001>
module attributes {stable_mosaic.version = 11 : i64} {
  func.func @kernel(%arg0: i32, %arg1: memref<8x48xbf16, #tpu.memory_space<vmem>>, %arg2: memref<1x4x512xbf16, #tpu.memory_space<vmem>>, %arg3: memref<1x8x384xf32, #tpu.memory_space<vmem>>, %arg4: memref<48x384xbf16, #tpu.memory_space<vmem>>) attributes {dimension_semantics = [#tpu.dimension_semantics<parallel>], iteration_bounds = array<i64: 2>, scalar_prefetch = 0 : i64, scratch_operands = 1 : i64, tpu.core_type = #tpu.core_type<tc>, window_params = [{pipeline_mode = #tpu.pipeline_mode<synchronous>, transform_indices = @transform_0, window_bounds = array<i64: 8, 48>}, {transform_indices = @transform_1, window_bounds = array<i64: 1, 4, 512>}, {transform_indices = @transform_2, window_bounds = array<i64: 1, 8, 384>}]} {
    %c0 = arith.constant 0 : index
    %c0_0 = arith.constant 0 : index
    %c0_1 = arith.constant 0 : index
    %0 = vector.load %arg2[%c0, %c0_0, %c0_1] : memref<1x4x512xbf16, #tpu.memory_space<vmem>>, vector<1x4x384xbf16>
    %1 = vector.shape_cast %0 : vector<1x4x384xbf16> to vector<4x384xbf16>
    %c0_2 = arith.constant 0 : index
    %c0_3 = arith.constant 0 : index
    %2 = vector.load %arg4[%c0_2, %c0_3] : memref<48x384xbf16, #tpu.memory_space<vmem>>, vector<4x384xbf16>
    tpu.vector_store %arg4[%c0_2, %c0_3], %1 {strides = array<i32>} : memref<48x384xbf16, #tpu.memory_space<vmem>>, vector<4x384xbf16>,
    %c0_4 = arith.constant 0 : index
    %c0_5 = arith.constant 0 : index
    %c1 = arith.constant 1 : index
    %3 = vector.load %arg2[%c0_4, %c0_5, %c1] : memref<1x4x512xbf16, #tpu.memory_space<vmem>>, vector<1x4x384xbf16>
    %4 = vector.shape_cast %3 : vector<1x4x384xbf16> to vector<4x384xbf16>
    %c4 = arith.constant 4 : index
    %c0_6 = arith.constant 0 : index
    %5 = vector.load %arg4[%c4, %c0_6] : memref<48x384xbf16, #tpu.memory_space<vmem>>, vector<4x384xbf16>
    tpu.vector_store %arg4[%c4, %c0_6], %4 {strides = array<i32>} : memref<48x384xbf16, #tpu.memory_space<vmem>>, vector<4x384xbf16>,
    %c0_7 = arith.constant 0 : index
    %c0_8 = arith.constant 0 : index
    %c2 = arith.constant 2 : index
    %6 = vector.load %arg2[%c0_7, %c0_8, %c2] : memref<1x4x512xbf16, #tpu.memory_space<vmem>>, vector<1x4x384xbf16>
    %7 = vector.shape_cast %6 : vector<1x4x384xbf16> to vector<4x384xbf16>
    %c8 = arith.constant 8 : index
    %c0_9 = arith.constant 0 : index
    %8 = vector.load %arg4[%c8, %c0_9] : memref<48x384xbf16, #tpu.memory_space<vmem>>, vector<4x384xbf16>
    tpu.vector_store %arg4[%c8, %c0_9], %7 {strides = array<i32>} : memref<48x384xbf16, #tpu.memory_space<vmem>>, vector<4x384xbf16>,
    %c0_10 = arith.constant 0 : index
    %c0_11 = arith.constant 0 : index
    %c18 = arith.constant 18 : index
    %9 = vector.load %arg2[%c0_10, %c0_11, %c18] : memref<1x4x512xbf16, #tpu.memory_space<vmem>>, vector<1x4x384xbf16>
    %10 = vector.shape_cast %9 : vector<1x4x384xbf16> to vector<4x384xbf16>
    %c12 = arith.constant 12 : index
    %c0_12 = arith.constant 0 : index
    %11 = vector.load %arg4[%c12, %c0_12] : memref<48x384xbf16, #tpu.memory_space<vmem>>, vector<4x384xbf16>
    tpu.vector_store %arg4[%c12, %c0_12], %10 {strides = array<i32>} : memref<48x384xbf16, #tpu.memory_space<vmem>>, vector<4x384xbf16>,
    %c0_13 = arith.constant 0 : index
    %c0_14 = arith.constant 0 : index
    %c19 = arith.constant 19 : index
    %12 = vector.load %arg2[%c0_13, %c0_14, %c19] : memref<1x4x512xbf16, #tpu.memory_space<vmem>>, vector<1x4x384xbf16>
    %13 = vector.shape_cast %12 : vector<1x4x384xbf16> to vector<4x384xbf16>
    %c16 = arith.constant 16 : index
    %c0_15 = arith.constant 0 : index
    %14 = vector.load %arg4[%c16, %c0_15] : memref<48x384xbf16, #tpu.memory_space<vmem>>, vector<4x384xbf16>
    tpu.vector_store %arg4[%c16, %c0_15], %13 {strides = array<i32>} : memref<48x384xbf16, #tpu.memory_space<vmem>>, vector<4x384xbf16>,
    %c0_16 = arith.constant 0 : index
    %c0_17 = arith.constant 0 : index
    %c20 = arith.constant 20 : index
    %15 = vector.load %arg2[%c0_16, %c0_17, %c20] : memref<1x4x512xbf16, #tpu.memory_space<vmem>>, vector<1x4x384xbf16>
    %16 = vector.shape_cast %15 : vector<1x4x384xbf16> to vector<4x384xbf16>
    %c20_18 = arith.constant 20 : index
    %c0_19 = arith.constant 0 : index
    %17 = vector.load %arg4[%c20_18, %c0_19] : memref<48x384xbf16, #tpu.memory_space<vmem>>, vector<4x384xbf16>
    tpu.vector_store %arg4[%c20_18, %c0_19], %16 {strides = array<i32>} : memref<48x384xbf16, #tpu.memory_space<vmem>>, vector<4x384xbf16>,
    %c0_20 = arith.constant 0 : index
    %c0_21 = arith.constant 0 : index
    %c36 = arith.constant 36 : index
    %18 = vector.load %arg2[%c0_20, %c0_21, %c36] : memref<1x4x512xbf16, #tpu.memory_space<vmem>>, vector<1x4x384xbf16>
    %19 = vector.shape_cast %18 : vector<1x4x384xbf16> to vector<4x384xbf16>
    %c24 = arith.constant 24 : index
    %c0_22 = arith.constant 0 : index
    %20 = vector.load %arg4[%c24, %c0_22] : memref<48x384xbf16, #tpu.memory_space<vmem>>, vector<4x384xbf16>
    tpu.vector_store %arg4[%c24, %c0_22], %19 {strides = array<i32>} : memref<48x384xbf16, #tpu.memory_space<vmem>>, vector<4x384xbf16>,
    %c0_23 = arith.constant 0 : index
    %c0_24 = arith.constant 0 : index
    %c37 = arith.constant 37 : index
    %21 = vector.load %arg2[%c0_23, %c0_24, %c37] : memref<1x4x512xbf16, #tpu.memory_space<vmem>>, vector<1x4x384xbf16>
    %22 = vector.shape_cast %21 : vector<1x4x384xbf16> to vector<4x384xbf16>
    %c28 = arith.constant 28 : index
    %c0_25 = arith.constant 0 : index
    %23 = vector.load %arg4[%c28, %c0_25] : memref<48x384xbf16, #tpu.memory_space<vmem>>, vector<4x384xbf16>
    tpu.vector_store %arg4[%c28, %c0_25], %22 {strides = array<i32>} : memref<48x384xbf16, #tpu.memory_space<vmem>>, vector<4x384xbf16>,
    %c0_26 = arith.constant 0 : index
    %c0_27 = arith.constant 0 : index
    %c38 = arith.constant 38 : index
    %24 = vector.load %arg2[%c0_26, %c0_27, %c38] : memref<1x4x512xbf16, #tpu.memory_space<vmem>>, vector<1x4x384xbf16>
    %25 = vector.shape_cast %24 : vector<1x4x384xbf16> to vector<4x384xbf16>
    %c32 = arith.constant 32 : index
    %c0_28 = arith.constant 0 : index
    %26 = vector.load %arg4[%c32, %c0_28] : memref<48x384xbf16, #tpu.memory_space<vmem>>, vector<4x384xbf16>
    tpu.vector_store %arg4[%c32, %c0_28], %25 {strides = array<i32>} : memref<48x384xbf16, #tpu.memory_space<vmem>>, vector<4x384xbf16>,
    %cst = arith.constant 1.000000e+00 : bf16
    %27 = vector.broadcast %cst : bf16 to vector<12x384xbf16>
    %c36_29 = arith.constant 36 : index
    %c0_30 = arith.constant 0 : index
    %28 = vector.load %arg4[%c36_29, %c0_30] : memref<48x384xbf16, #tpu.memory_space<vmem>>, vector<12x384xbf16>
    tpu.vector_store %arg4[%c36_29, %c0_30], %27 {strides = array<i32>} : memref<48x384xbf16, #tpu.memory_space<vmem>>, vector<12x384xbf16>,
    %c0_31 = arith.constant 0 : index
    %c0_32 = arith.constant 0 : index
    %29 = vector.load %arg1[%c0_31, %c0_32] : memref<8x48xbf16, #tpu.memory_space<vmem>>, vector<8x48xbf16>
    %c0_33 = arith.constant 0 : index
    %c0_34 = arith.constant 0 : index
    %30 = vector.load %arg4[%c0_33, %c0_34] : memref<48x384xbf16, #tpu.memory_space<vmem>>, vector<48x384xbf16>
    %cst_35 = arith.constant dense<0.000000e+00> : vector<8x384xf32>
    %31 = tpu.matmul %29, %30, %cst_35 {dimension_numbers = #tpu.dot_dimension_numbers<[1], [0], [0], [1], [0, 0, 1, 1], [], []>} : vector<8x48xbf16>, vector<48x384xbf16>, vector<8x384xf32> -> vector<8x384xf32>
    %c0_36 = arith.constant 0 : index
    %c0_37 = arith.constant 0 : index
    %c0_38 = arith.constant 0 : index
    %32 = vector.load %arg3[%c0_36, %c0_37, %c0_38] : memref<1x8x384xf32, #tpu.memory_space<vmem>>, vector<1x8x384xf32>
    %33 = vector.shape_cast %32 : vector<1x8x384xf32> to vector<8x384xf32>
    %34 = vector.shape_cast %31 : vector<8x384xf32> to vector<1x8x384xf32>
    tpu.vector_store %arg3[%c0_36, %c0_37, %c0_38], %34 {strides = array<i32>} : memref<1x8x384xf32, #tpu.memory_space<vmem>>, vector<1x8x384xf32>,
    return
  }
  func.func @transform_0(%arg0: i32) -> (i32, i32) {
    %c0_i32 = arith.constant 0 : i32
    %c0_i32_0 = arith.constant 0 : i32
    %c0_i32_1 = arith.constant 0 : i32
    return %c0_i32, %c0_i32_0 : i32, i32
  }
  func.func @transform_1(%arg0: i32) -> (i32, i32, i32) {
    %c0_i32 = arith.constant 0 : i32
    %c0_i32_0 = arith.constant 0 : i32
    %c0_i32_1 = arith.constant 0 : i32
    return %arg0, %c0_i32, %c0_i32_0 : i32, i32, i32
  }
  func.func @transform_2(%arg0: i32) -> (i32, i32, i32) {
    %c0_i32 = arith.constant 0 : i32
    %c0_i32_0 = arith.constant 0 : i32
    %c0_i32_1 = arith.constant 0 : i32
    return %arg0, %c0_i32, %c0_i32_0 : i32, i32, i32
  }
}

</mosaic_0001>

<llo_original>
// kernel: tpu_custom_call.1
$region0: #{tpu_custom_call.1}
  #allocation0 [shape = 'u32[]', space=smem, size = 0x4, offset = 0x4, fixed_abs, tag = 'smem constant byte address 0x4 - core index']
  #allocation1 [shape = 'u32[144,128]{1,0:T(1,128)}', space=vmem, size = 0x12000, scoped, tag = 'internal scratch']
  #allocation2 [shape = 'bf16[48,384]{1,0:T(8,128)(2,1)}', space=vmem, size = 0x9000, scoped, tag = 'scratch operand']
  %s0 = inlined_call_operand.hbm [shape: bf16[8,48], index: 0, kind: input, shape index: {}]
  %s1 = inlined_call_operand.hbm [shape: bf16[2,4,512], index: 1, kind: input, shape index: {}]
  %s2 = inlined_call_operand.hbm [shape: f32[2,8,384], index: 2, kind: output, shape index: {}]
  %s3 = sld [smem:[#allocation0]]
  $region49: #{tpu_custom_call.1} parent=0
    _
  %s5 = ssub.s32 1, %s3
  %s6 = scalar_select 0, %s5, %s3
  $region1: #{tpu_custom_call.1} parent=0
    #allocation3 [shape = 'u8[2048]{0}', space=vmem, size = 0x800, scoped, tag = 'input window, operand 0, single buffered']
    #allocation4 [shape = 's32[2]{0}', space=sflag, size = 0x8, scoped, tag = 'scoped memory for tpu_custom_call.1']
    #allocation5 [shape = 's32[2]{0}', space=sflag, size = 0x8, scoped, tag = 'scoped memory for tpu_custom_call.1']
    #allocation6 [shape = 'u8[8192]{0}', space=vmem, size = 0x2000, scoped, tag = 'input window, operand 1']
    #allocation7 [shape = 's32[2]{0}', space=sflag, size = 0x8, scoped, tag = 'scoped memory for tpu_custom_call.1']
    #allocation8 [shape = 'u8[24576]{0}', space=vmem, size = 0x6000, scoped, tag = 'output window, operand 0']
    %7 = vsyncpa [#allocation4], 0
    %8 = vsyncpa [#allocation7], 0
    %s9 = scalar_lea.sflag [#allocation7], 1
    %10 = vsyncpa %s9, 0
    %11 = vsyncpa [#allocation5], 0
    %s12 = scalar_lea.sflag [#allocation5], 1
    %13 = vsyncpa %s12, 0
    loop: start=0, step=1, limit=4
    $region2: #{tpu_custom_call.1} parent=1 // loop_pre_header
      _
    $region3: #{tpu_custom_call.1} parent=1 // loop_header
      %s15 = sphi 0, %s19
      %p16 = scmp.ge.s32.totalorder %s15, 4
      %s23 = sphi 0, %s23
      %s25 = sphi 0, %s23
      %s26 = sphi 0, %s25
      %s40 = sphi 0, %s26
      %s46 = sphi 0, %s48
      %s49 = sphi 0, %s46
      %s50 = sphi 0, %s49
      %s66 = sphi 0, %s50
      %s72 = sphi 0, %s74
      %s75 = sphi 0, %s72
      %s76 = sphi 0, %s75
      %s92 = sphi 0, %s76
    $region4: #{tpu_custom_call.1} parent=1 // loop_header_branch
      %18 = sbr.rel (%p16) target = $region8
    $region5: #{tpu_custom_call.1} parent=1 // loop_body
      %s20 = ssub.s32 %s15, 1
      %s21 = ssub.s32 %s15, 2
      %s22 = sadd.s32 %s15, 1
      %s24 = sadd.s32 %s23, 1
      %p27 = scmp.eq.s32.totalorder %s15, 1
      %p28 = scmp.ne.s32.totalorder %s23, %s25
      %p29 = scmp.eq.s32.totalorder %s15, 0
      %p30 = por %p28, %p29
      %p31 = scmp.ne.s32.totalorder %s23, %s25
      %p32 = scmp.eq.s32.totalorder %s20, 1
      %p33 = por %p31, %p32
      %p34 = scmp.ne.s32.totalorder %s25, %s26
      %p35 = scmp.eq.s32.totalorder %s20, 0
      %p36 = por %p34, %p35
      %p37 = scmp.ne.s32.totalorder %s25, %s26
      %p38 = scmp.eq.s32.totalorder %s21, 1
      %p39 = por %p37, %p38
      %p41 = scmp.ne.s32.totalorder %s26, %s40
      %p42 = scmp.eq.s32.totalorder %s21, 0
      %p43 = por %p41, %p42
      %s44 = ssub.s32 %s15, %s22
      %p45 = scmp.eq.s32.totalorder %s44, 0
      %s47 = sadd.s32 %s46, 1
      %s48 = scalar_select %p45, %s46, %s47
      %p51 = pneg %p45
      %p52 = scmp.eq.s32.totalorder %s15, 1
      %p53 = por %p51, %p52
      %p54 = scmp.ne.s32.totalorder %s46, %s49
      %p55 = scmp.eq.s32.totalorder %s15, 0
      %p56 = por %p54, %p55
      %p57 = scmp.ne.s32.totalorder %s46, %s49
      %p58 = scmp.eq.s32.totalorder %s20, 1
      %p59 = por %p57, %p58
      %p60 = scmp.ne.s32.totalorder %s49, %s50
      %p61 = scmp.eq.s32.totalorder %s20, 0
      %p62 = por %p60, %p61
      %p63 = scmp.ne.s32.totalorder %s49, %s50
      %p64 = scmp.eq.s32.totalorder %s21, 1
      %p65 = por %p63, %p64
      %p67 = scmp.ne.s32.totalorder %s50, %s66
      %p68 = scmp.eq.s32.totalorder %s21, 0
      %p69 = por %p67, %p68
      %s70 = ssub.s32 %s15, %s22
      %p71 = scmp.eq.s32.totalorder %s70, 0
      %s73 = sadd.s32 %s72, 1
      %s74 = scalar_select %p71, %s72, %s73
      %p77 = pneg %p71
      %p78 = scmp.eq.s32.totalorder %s15, 1
      %p79 = por %p77, %p78
      %p80 = scmp.ne.s32.totalorder %s72, %s75
      %p81 = scmp.eq.s32.totalorder %s15, 0
      %p82 = por %p80, %p81
      %p83 = scmp.ne.s32.totalorder %s72, %s75
      %p84 = scmp.eq.s32.totalorder %s20, 1
      %p85 = por %p83, %p84
      %p86 = scmp.ne.s32.totalorder %s75, %s76
      %p87 = scmp.eq.s32.totalorder %s20, 0
      %p88 = por %p86, %p87
      %p89 = scmp.ne.s32.totalorder %s75, %s76
      %p90 = scmp.eq.s32.totalorder %s21, 1
      %p91 = por %p89, %p90
      %p93 = scmp.ne.s32.totalorder %s76, %s92
      %p94 = scmp.eq.s32.totalorder %s21, 0
      %p95 = por %p93, %p94
      %p96 = scmp.le.s32.totalorder 1, %s15
      %p97 = scmp.lt.s32.totalorder %s15, 3
      %p98 = pnand %p96, %p97
      %p99 = pneg %p98
      // Predicated region
      $region9: #{tpu_custom_call.1} parent=5 // pred_check
        _
      $region10: #{tpu_custom_call.1} parent=5 // pred_check_branch
        %101 = sbr.rel (%p98) target = $region12
      $region11: #{tpu_custom_call.1} parent=5 // pred_region
        %s102 = ssub.s32 %s15, 1
        // Predicated region
        $region13: #{tpu_custom_call.1} parent=11 // pred_check
          %p103 = pneg %p36
        $region14: #{tpu_custom_call.1} parent=11 // pred_check_branch
          %105 = sbr.rel (%p103) target = $region16
        $region15: #{tpu_custom_call.1} parent=11 // pred_region
          %s107 = ssub.s32 64, 64
          %108 = vsyncadd [#allocation4], %s107
          %s110 = sshll.u32 [#allocation3], 4
          %s111 = int_to_ptr.vmem [resolvable:$true] %s110
          %113 = dma.hbm_to_vmem [thread:$0]  %s0, 64, %s111, [#allocation4]
        $region16: #{tpu_custom_call.1} parent=11 // pred_fallthru
          _
      $region12: #{tpu_custom_call.1} parent=5 // pred_fallthru
        _
      %p114 = scmp.lt.s32.totalorder %s15, 2
      // Predicated region
      $region17: #{tpu_custom_call.1} parent=5 // pred_check
        %p115 = pneg %p114
      $region18: #{tpu_custom_call.1} parent=5 // pred_check_branch
        %117 = sbr.rel (%p115) target = $region20
      $region19: #{tpu_custom_call.1} parent=5 // pred_region
        // Predicated region
        $region21: #{tpu_custom_call.1} parent=19 // pred_check
          %p118 = pneg %p56
        $region22: #{tpu_custom_call.1} parent=19 // pred_check_branch
          %120 = sbr.rel (%p118) target = $region24
        $region23: #{tpu_custom_call.1} parent=19 // pred_region
          %s121 = sand.u32 %s46, 1
          %s122 = scalar_lea.sflag [#allocation7], %s121
          %s123 = sand.u32 %s46, 1
          %s124 = smul.addr %s123, 8
          %s125 = scalar_lea.vmem [#allocation6], %s124
          %s127 = ssub.s32 128, 128
          %128 = vsyncadd %s122, %s127
          %s129 = smul.addr %s15, 4
          %s130 = smul.addr %s129, 32
          %s131 = scalar_lea.hbm %s1, %s130
          %s133 = sshll.u32 %s125, 4
          %s134 = int_to_ptr.vmem [resolvable:$true] %s133
          %136 = dma.hbm_to_vmem [thread:$0]  %s131, 128, %s134, %s122
        $region24: #{tpu_custom_call.1} parent=19 // pred_fallthru
          _
      $region20: #{tpu_custom_call.1} parent=5 // pred_fallthru
        _
      %p137 = scmp.le.s32.totalorder 1, %s15
      %p138 = scmp.lt.s32.totalorder %s15, 3
      %p139 = pnand %p137, %p138
      %p140 = pneg %p139
      // Predicated region
      $region25: #{tpu_custom_call.1} parent=5 // pred_check
        _
      $region26: #{tpu_custom_call.1} parent=5 // pred_check_branch
        %142 = sbr.rel (%p139) target = $region28
      $region27: #{tpu_custom_call.1} parent=5 // pred_region
        %s143 = ssub.s32 %s15, 1
        // Predicated region
        $region29: #{tpu_custom_call.1} parent=27 // pred_check
          %p144 = pneg %p36
        $region30: #{tpu_custom_call.1} parent=27 // pred_check_branch
          %146 = sbr.rel (%p144) target = $region32
        $region31: #{tpu_custom_call.1} parent=27 // pred_region
          %147 = dma.done [#allocation4], 64
        $region32: #{tpu_custom_call.1} parent=27 // pred_fallthru
          _
        %s148 = sand.u32 %s49, 1
        %s149 = scalar_lea.sflag [#allocation7], %s148
        %s150 = sand.u32 %s49, 1
        %s151 = smul.addr %s150, 8
        %s152 = scalar_lea.vmem [#allocation6], %s151
        // Predicated region
        $region33: #{tpu_custom_call.1} parent=27 // pred_check
          %p153 = pneg %p62
        $region34: #{tpu_custom_call.1} parent=27 // pred_check_branch
          %155 = sbr.rel (%p153) target = $region36
        $region35: #{tpu_custom_call.1} parent=27 // pred_region
          %156 = dma.done %s149, 128
        $region36: #{tpu_custom_call.1} parent=27 // pred_fallthru
          _
        %p157 = pneg %p36
        %p158 = pneg %p33
        %s159 = sand.u32 %s49, 1
        %s160 = scalar_lea.sflag [#allocation7], %s159
        %s161 = sand.u32 %s49, 1
        %s162 = smul.addr %s161, 8
        %s163 = scalar_lea.vmem [#allocation6], %s162
        %p164 = pneg %p62
        %p165 = pneg %p59
        %p166 = pneg %p88
        %p167 = pneg %p85
        %s168 = sand.u32 %s75, 1
        %s169 = scalar_lea.sflag [#allocation5], %s168
        %s170 = sand.u32 %s75, 1
        %s171 = smul.addr %s170, 24
        %s172 = scalar_lea.vmem [#allocation8], %s171
        %v175 = vld [vmem:[%s152] sm:$0x3f]
        %v177 = vcombine.high %v175, %v175
        %v179 = vunpack.c.l.s4 1983009808
        %v180 = vunpack.c.0.s8 %v179
        %v181 = vlaneseq
        %v182 = vshrl.u32 %v181, 7
        %v183 = vsub.s32 %v180, %v182
        %v184 = vrot.slane %v175, %v183
        %v186 = vunpack.c.l.s4 1983009808
        %v187 = vunpack.c.0.s8 %v186
        %v188 = vlaneseq
        %v189 = vshrl.u32 %v188, 7
        %v190 = vsub.s32 %v187, %v189
        %v191 = vrot.slane %v177, %v190
        %194 = vst [vmem:[#allocation2] sm:$0x33] %v184
        %195 = vst [vmem:[#allocation2 + $0x8] sm:$0x3] %v191
        %v196 = vld [vmem:[%s152] sm:$0xff]
        %v198 = vcombine.low %v196, %v196
        %v200 = vunpack.c.l.s4 1983009808
        %v201 = vunpack.c.0.s8 %v200
        %v202 = vlaneseq
        %v203 = vshrl.u32 %v202, 7
        %v204 = vsub.s32 %v201, %v203
        %v205 = vrot.slane %v198, %v204
        %v207 = vunpack.c.l.s4 1983009808
        %v208 = vunpack.c.0.s8 %v207
        %v209 = vlaneseq
        %v210 = vshrl.u32 %v209, 7
        %v211 = vsub.s32 %v208, %v210
        %v212 = vrot.slane %v196, %v211
        %213 = vrot.lane.b32.xlu0 %v205, 127
        %v214 = vpop.permute.xlu0 %213
        %215 = vrot.lane.b32.xlu0 %v212, 127
        %v216 = vpop.permute.xlu0 %215
        %v217 = vrot.slane %v214, 4
        %v218 = vrot.slane %v216, 4
        %vm219 = vcmask 1043456
        %v220 = vsel %vm219, %v217, %v218
        %vm221 = vcmask 1039360
        %v222 = vsel %vm221, %v214, %v220
        %v223 = vsel %vm221, %v216, %v218
        %226 = vst [vmem:[#allocation2] sm:$0xcc] %v222
        %227 = vst [vmem:[#allocation2 + $0x8] sm:$0xc] %v223
        %v228 = vld [vmem:[%s152] sm:$0xff]
        %v230 = vcombine.high %v228, %v228
        %v232 = vunpack.c.l.s4 1983009808
        %v233 = vunpack.c.0.s8 %v232
        %v234 = vlaneseq
        %v235 = vshrl.u32 %v234, 7
        %v236 = vsub.s32 %v233, %v235
        %v237 = vrot.slane %v228, %v236
        %v239 = vunpack.c.l.s4 1983009808
        %v240 = vunpack.c.0.s8 %v239
        %v241 = vlaneseq
        %v242 = vshrl.u32 %v241, 7
        %v243 = vsub.s32 %v240, %v242
        %v244 = vrot.slane %v230, %v243
        %245 = vrot.lane.b32.xlu0 %v237, 126
        %v246 = vpop.permute.xlu0 %245
        %247 = vrot.lane.b32.xlu0 %v244, 126
        %v248 = vpop.permute.xlu0 %247
        %v249 = vrot.slane %v246, 4
        %v250 = vrot.slane %v248, 4
        %v251 = vsel %vm219, %v249, %v250
        %vm252 = vcmask 1031168
        %v253 = vsel %vm252, %v246, %v251
        %v254 = vsel %vm252, %v248, %v250
        %257 = vst [vmem:[#allocation2 + $0xc] sm:$0x33] %v253
        %258 = vst [vmem:[#allocation2 + $0x14] sm:$0x3] %v254
        %v259 = vld [vmem:[%s152] sm:$0xff]
        %v261 = vcombine.low %v259, %v259
        %v263 = vunpack.c.l.s4 1983009808
        %v264 = vunpack.c.0.s8 %v263
        %v265 = vlaneseq
        %v266 = vshrl.u32 %v265, 7
        %v267 = vsub.s32 %v264, %v266
        %v268 = vrot.slane %v261, %v267
        %v270 = vunpack.c.l.s4 1983009808
        %v271 = vunpack.c.0.s8 %v270
        %v272 = vlaneseq
        %v273 = vshrl.u32 %v272, 7
        %v274 = vsub.s32 %v271, %v273
        %v275 = vrot.slane %v259, %v274
        %276 = vrot.lane.b32.xlu0 %v268, 110
        %v277 = vpop.permute.xlu0 %276
        %278 = vrot.lane.b32.xlu0 %v275, 110
        %v279 = vpop.permute.xlu0 %278
        %v280 = vrot.slane %v277, 4
        %v281 = vrot.slane %v279, 4
        %v282 = vsel %vm219, %v280, %v281
        %vm283 = vcmask 900096
        %v284 = vsel %vm283, %v277, %v282
        %v285 = vsel %vm283, %v279, %v281
        %288 = vst [vmem:[#allocation2 + $0xc] sm:$0xcc] %v284
        %289 = vst [vmem:[#allocation2 + $0x14] sm:$0xc] %v285
        %v290 = vld [vmem:[%s152] sm:$0xff]
        %v292 = vcombine.high %v290, %v290
        %v294 = vunpack.c.l.s4 1983009808
        %v295 = vunpack.c.0.s8 %v294
        %v296 = vlaneseq
        %v297 = vshrl.u32 %v296, 7
        %v298 = vsub.s32 %v295, %v297
        %v299 = vrot.slane %v290, %v298
        %v301 = vunpack.c.l.s4 1983009808
        %v302 = vunpack.c.0.s8 %v301
        %v303 = vlaneseq
        %v304 = vshrl.u32 %v303, 7
        %v305 = vsub.s32 %v302, %v304
        %v306 = vrot.slane %v292, %v305
        %307 = vrot.lane.b32.xlu0 %v299, 109
        %v308 = vpop.permute.xlu0 %307
        %309 = vrot.lane.b32.xlu0 %v306, 109
        %v310 = vpop.permute.xlu0 %309
        %v311 = vrot.slane %v308, 4
        %v312 = vrot.slane %v310, 4
        %v313 = vsel %vm219, %v311, %v312
        %vm314 = vcmask 891904
        %v315 = vsel %vm314, %v308, %v313
        %v316 = vsel %vm314, %v310, %v312
        %319 = vst [vmem:[#allocation2 + $0x18] sm:$0x33] %v315
        %320 = vst [vmem:[#allocation2 + $0x20] sm:$0x3] %v316
        %v321 = vld [vmem:[%s152] sm:$0xff]
        %v323 = vcombine.low %v321, %v321
        %v325 = vunpack.c.l.s4 1983009808
        %v326 = vunpack.c.0.s8 %v325
        %v327 = vlaneseq
        %v328 = vshrl.u32 %v327, 7
        %v329 = vsub.s32 %v326, %v328
        %v330 = vrot.slane %v323, %v329
        %v332 = vunpack.c.l.s4 1983009808
        %v333 = vunpack.c.0.s8 %v332
        %v334 = vlaneseq
        %v335 = vshrl.u32 %v334, 7
        %v336 = vsub.s32 %v333, %v335
        %v337 = vrot.slane %v321, %v336
        %338 = vrot.lane.b32.xlu0 %v330, 108
        %v339 = vpop.permute.xlu0 %338
        %340 = vrot.lane.b32.xlu0 %v337, 108
        %v341 = vpop.permute.xlu0 %340
        %v342 = vrot.slane %v339, 4
        %v343 = vrot.slane %v341, 4
        %v344 = vsel %vm219, %v342, %v343
        %vm345 = vcmask 883712
        %v346 = vsel %vm345, %v339, %v344
        %v347 = vsel %vm345, %v341, %v343
        %350 = vst [vmem:[#allocation2 + $0x18] sm:$0xcc] %v346
        %351 = vst [vmem:[#allocation2 + $0x20] sm:$0xc] %v347
        %v352 = vld [vmem:[%s152] sm:$0xff]
        %v354 = vcombine.high %v352, %v352
        %v356 = vunpack.c.l.s4 1983009808
        %v357 = vunpack.c.0.s8 %v356
        %v358 = vlaneseq
        %v359 = vshrl.u32 %v358, 7
        %v360 = vsub.s32 %v357, %v359
        %v361 = vrot.slane %v352, %v360
        %v363 = vunpack.c.l.s4 1983009808
        %v364 = vunpack.c.0.s8 %v363
        %v365 = vlaneseq
        %v366 = vshrl.u32 %v365, 7
        %v367 = vsub.s32 %v364, %v366
        %v368 = vrot.slane %v354, %v367
        %369 = vrot.lane.b32.xlu0 %v361, 92
        %v370 = vpop.permute.xlu0 %369
        %371 = vrot.lane.b32.xlu0 %v368, 92
        %v372 = vpop.permute.xlu0 %371
        %v373 = vrot.slane %v370, 4
        %v374 = vrot.slane %v372, 4
        %v375 = vsel %vm219, %v373, %v374
        %vm376 = vcmask 752640
        %v377 = vsel %vm376, %v370, %v375
        %v378 = vsel %vm376, %v372, %v374
        %381 = vst [vmem:[#allocation2 + $0x24] sm:$0x33] %v377
        %382 = vst [vmem:[#allocation2 + $0x2c] sm:$0x3] %v378
        %v383 = vld [vmem:[%s152] sm:$0xff]
        %v385 = vcombine.low %v383, %v383
        %v387 = vunpack.c.l.s4 1983009808
        %v388 = vunpack.c.0.s8 %v387
        %v389 = vlaneseq
        %v390 = vshrl.u32 %v389, 7
        %v391 = vsub.s32 %v388, %v390
        %v392 = vrot.slane %v385, %v391
        %v394 = vunpack.c.l.s4 1983009808
        %v395 = vunpack.c.0.s8 %v394
        %v396 = vlaneseq
        %v397 = vshrl.u32 %v396, 7
        %v398 = vsub.s32 %v395, %v397
        %v399 = vrot.slane %v383, %v398
        %400 = vrot.lane.b32.xlu0 %v392, 91
        %v401 = vpop.permute.xlu0 %400
        %402 = vrot.lane.b32.xlu0 %v399, 91
        %v403 = vpop.permute.xlu0 %402
        %v404 = vrot.slane %v401, 4
        %v405 = vrot.slane %v403, 4
        %v406 = vsel %vm219, %v404, %v405
        %vm407 = vcmask 744448
        %v408 = vsel %vm407, %v401, %v406
        %v409 = vsel %vm407, %v403, %v405
        %412 = vst [vmem:[#allocation2 + $0x24] sm:$0xcc] %v408
        %413 = vst [vmem:[#allocation2 + $0x2c] sm:$0xc] %v409
        %v414 = vld [vmem:[%s152] sm:$0xff]
        %v416 = vcombine.high %v414, %v414
        %v418 = vunpack.c.l.s4 1983009808
        %v419 = vunpack.c.0.s8 %v418
        %v420 = vlaneseq
        %v421 = vshrl.u32 %v420, 7
        %v422 = vsub.s32 %v419, %v421
        %v423 = vrot.slane %v414, %v422
        %v425 = vunpack.c.l.s4 1983009808
        %v426 = vunpack.c.0.s8 %v425
        %v427 = vlaneseq
        %v428 = vshrl.u32 %v427, 7
        %v429 = vsub.s32 %v426, %v428
        %v430 = vrot.slane %v416, %v429
        %431 = vrot.lane.b32.xlu0 %v423, 90
        %v432 = vpop.permute.xlu0 %431
        %433 = vrot.lane.b32.xlu0 %v430, 90
        %v434 = vpop.permute.xlu0 %433
        %v435 = vrot.slane %v432, 4
        %v436 = vrot.slane %v434, 4
        %v437 = vsel %vm219, %v435, %v436
        %vm438 = vcmask 736256
        %v439 = vsel %vm438, %v432, %v437
        %v440 = vsel %vm438, %v434, %v436
        %443 = vst [vmem:[#allocation2 + $0x30] sm:$0x33] %v439
        %444 = vst [vmem:[#allocation2 + $0x38] sm:$0x3] %v440
        %445 = vst [vmem:[#allocation2 + $0x30] sm:$0xcc] 1065369472
        %446 = vst [vmem:[#allocation2 + $0x38] sm:$0xc] 1065369472
        %447 = vst [vmem:[#allocation2 + $0x3c] sm:$0xff] 1065369472
        %448 = vst [vmem:[#allocation2 + $0x44] sm:$0xf] 1065369472
        %v449 = vld [vmem:[#allocation3] sm:$0xf]
        %v450 = vld [vmem:[#allocation2] sm:$0xff]
        %v451 = vld [vmem:[#allocation2 + $0x8] sm:$0xf]
        %v452 = vld [vmem:[#allocation2 + $0xc] sm:$0xff]
        %v453 = vld [vmem:[#allocation2 + $0x14] sm:$0xf]
        %v454 = vld [vmem:[#allocation2 + $0x18] sm:$0xff]
        %v455 = vld [vmem:[#allocation2 + $0x20] sm:$0xf]
        %v456 = vld [vmem:[#allocation2 + $0x24] sm:$0xff]
        %v457 = vld [vmem:[#allocation2 + $0x2c] sm:$0xf]
        %v458 = vld [vmem:[#allocation2 + $0x30] sm:$0xff]
        %v459 = vld [vmem:[#allocation2 + $0x38] sm:$0xf]
        %v460 = vld [vmem:[#allocation2 + $0x3c] sm:$0xff]
        %v461 = vld [vmem:[#allocation2 + $0x44] sm:$0xf]
        %v474 = vunpack.c.l.b16 %v450
        %v475 = vunpack.c.h.b16 %v450
        %v476 = vunpack.c.l.b16 %v451
        %v477 = vunpack.c.l.b16 %v452
        %v478 = vunpack.c.h.b16 %v452
        %v479 = vunpack.c.l.b16 %v453
        %v480 = vunpack.c.l.b16 %v454
        %v481 = vunpack.c.h.b16 %v454
        %v482 = vunpack.c.l.b16 %v455
        %v483 = vunpack.c.l.b16 %v456
        %v484 = vunpack.c.h.b16 %v456
        %v485 = vunpack.c.l.b16 %v457
        %v486 = vunpack.c.l.b16 %v458
        %v487 = vunpack.c.h.b16 %v458
        %v488 = vunpack.c.l.b16 %v459
        %v489 = vunpack.c.l.b16 %v460
        %v490 = vunpack.c.h.b16 %v460
        %v491 = vunpack.c.l.b16 %v461
        %v492 = vpack.c.b16 %v477, %v474
        %v493 = vpack.c.b16 %v478, %v475
        %v494 = vpack.c.b16 %v479, %v476
        %v495 = vpack.c.b16 %v483, %v480
        %v496 = vpack.c.b16 %v484, %v481
        %v497 = vpack.c.b16 %v485, %v482
        %v498 = vpack.c.b16 %v489, %v486
        %v499 = vpack.c.b16 %v490, %v487
        %v500 = vpack.c.b16 %v491, %v488
        %vm510 = vcmask 392192
        %v512 = vsel %vm510, %v449, 0
        %514 = vmatprep.subr.bf16.mxu0 0
        %515 = vmatpush1.bf16.msra.mxu0 0
        %516 = vmatprep.subr.bf16.mxu0 0
        %517 = vmatpush1.bf16.msra.mxu0 0
        %518 = vmatprep.subr.bf16.mxu0 0
        %519 = vmatpush1.bf16.msra.mxu0 0
        %520 = vmatprep.subr.bf16.mxu0 0
        %521 = vmatpush1.bf16.msra.mxu0 0
        %522 = vmatprep.subr.bf16.mxu0 0
        %523 = vmatpush1.bf16.msra.mxu0 0
        %524 = vmatprep.subr.bf16.mxu0 %v499
        %525 = vmatpush1.bf16.msra.mxu0 %v498
        %526 = vmatprep.subr.bf16.mxu0 %v496
        %527 = vmatpush1.bf16.msra.mxu0 %v495
        %528 = vmatprep.subr.bf16.mxu0 %v493
        %529 = vmatpush1.bf16.msra.mxu0 %v492
        %530 = vmatprep.subr.bf16.mxu0 0
        %531 = vmatpush2.bf16.msra.mxu0 0
        %532 = vmatprep.subr.bf16.mxu0 0
        %533 = vmatpush2.bf16.msra.mxu0 0
        %534 = vmatprep.subr.bf16.mxu0 0
        %535 = vmatpush2.bf16.msra.mxu0 0
        %536 = vmatprep.subr.bf16.mxu0 0
        %537 = vmatpush2.bf16.msra.mxu0 0
        %538 = vmatprep.subr.bf16.mxu0 0
        %539 = vmatpush2.bf16.msra.mxu0 0
        %540 = vmatprep.subr.bf16.mxu0 0
        %541 = vmatpush2.bf16.msra.mxu0 0
        %542 = vmatprep.subr.bf16.mxu0 0
        %543 = vmatpush2.bf16.msra.mxu0 0
        %544 = vmatprep.subr.bf16.mxu0 0
        %545 = vmatpush2.bf16.msra.mxu0 0
        %546 = vmatprep.mubr.bf16.mxu0 0
        %547 = vmatmul.mubr.bf16.gmra.mxu0 %v512
        %v548 = vpop.f32.mrf.mxu0
        %v549 = vadd.f32 0.0, %v548
        %v550 = vpop.f32.mrf.mxu0
        %v551 = vadd.f32 0.0, %v550
        %v552 = vpop.f32.mrf.mxu0
        %v553 = vpop.f32.mrf.mxu0
        %554 = vdwg.mxu0
        %555 = vmatprep.subr.bf16.mxu0 0
        %556 = vmatpush1.bf16.msra.mxu0 0
        %557 = vmatprep.subr.bf16.mxu0 0
        %558 = vmatpush1.bf16.msra.mxu0 0
        %559 = vmatprep.subr.bf16.mxu0 0
        %560 = vmatpush1.bf16.msra.mxu0 0
        %561 = vmatprep.subr.bf16.mxu0 0
        %562 = vmatpush1.bf16.msra.mxu0 0
        %563 = vmatprep.subr.bf16.mxu0 0
        %564 = vmatpush1.bf16.msra.mxu0 0
        %565 = vmatprep.subr.bf16.mxu0 0
        %566 = vmatpush1.bf16.msra.mxu0 %v500
        %567 = vmatprep.subr.bf16.mxu0 0
        %568 = vmatpush1.bf16.msra.mxu0 %v497
        %569 = vmatprep.subr.bf16.mxu0 0
        %570 = vmatpush1.bf16.msra.mxu0 %v494
        %571 = vmatprep.subr.bf16.mxu0 0
        %572 = vmatpush2.bf16.msra.mxu0 0
        %573 = vmatprep.subr.bf16.mxu0 0
        %574 = vmatpush2.bf16.msra.mxu0 0
        %575 = vmatprep.subr.bf16.mxu0 0
        %576 = vmatpush2.bf16.msra.mxu0 0
        %577 = vmatprep.subr.bf16.mxu0 0
        %578 = vmatpush2.bf16.msra.mxu0 0
        %579 = vmatprep.subr.bf16.mxu0 0
        %580 = vmatpush2.bf16.msra.mxu0 0
        %581 = vmatprep.subr.bf16.mxu0 0
        %582 = vmatpush2.bf16.msra.mxu0 0
        %583 = vmatprep.subr.bf16.mxu0 0
        %584 = vmatpush2.bf16.msra.mxu0 0
        %585 = vmatprep.subr.bf16.mxu0 0
        %586 = vmatpush2.bf16.msra.mxu0 0
        %587 = vmatprep.mubr.bf16.mxu0 0
        %588 = vmatmul.mubr.bf16.gmra.mxu0 %v512
        %v589 = vpop.f32.mrf.mxu0
        %v590 = vadd.f32 0.0, %v589
        %v591 = vpop.f32.mrf.mxu0
        %v592 = vpop.f32.mrf.mxu0
        %v593 = vpop.f32.mrf.mxu0
        %594 = vdwg.mxu0
        %595 = vst [vmem:[%s172] sm:$0xff] %v549
        %596 = vst [vmem:[%s172 + $0x8] sm:$0xff] %v551
        %597 = vst [vmem:[%s172 + $0x10] sm:$0xff] %v590
        %s598 = sand.u32 %s75, 1
        %s599 = scalar_lea.sflag [#allocation5], %s598
        %s600 = sand.u32 %s75, 1
        %s601 = smul.addr %s600, 24
        %s602 = scalar_lea.vmem [#allocation8], %s601
        // Predicated region
        $region37: #{tpu_custom_call.1} parent=27 // pred_check
          %p603 = pneg %p85
        $region38: #{tpu_custom_call.1} parent=27 // pred_check_branch
          %605 = sbr.rel (%p603) target = $region40
        $region39: #{tpu_custom_call.1} parent=27 // pred_region
          %s607 = ssub.s32 384, 384
          %608 = vsyncadd %s599, %s607
          %s609 = smul.addr %s20, 3
          %s610 = smul.addr %s609, 128
          %s611 = scalar_lea.hbm %s2, %s610
          %s613 = sshll.u32 %s602, 4
          %s614 = int_to_ptr.vmem [resolvable:$true] %s613
          %616 = dma.vmem_to_hbm [thread:$0]  %s614, 384, %s611, %s599
        $region40: #{tpu_custom_call.1} parent=27 // pred_fallthru
          _
      $region28: #{tpu_custom_call.1} parent=5 // pred_fallthru
        _
      %p617 = scmp.le.s32.totalorder 2, %s15
      // Predicated region
      $region41: #{tpu_custom_call.1} parent=5 // pred_check
        %p618 = pneg %p617
      $region42: #{tpu_custom_call.1} parent=5 // pred_check_branch
        %620 = sbr.rel (%p618) target = $region44
      $region43: #{tpu_custom_call.1} parent=5 // pred_region
        %s621 = ssub.s32 %s15, 2
        // Predicated region
        $region45: #{tpu_custom_call.1} parent=43 // pred_check
          %p622 = pneg %p91
        $region46: #{tpu_custom_call.1} parent=43 // pred_check_branch
          %624 = sbr.rel (%p622) target = $region48
        $region47: #{tpu_custom_call.1} parent=43 // pred_region
          %s625 = sand.u32 %s76, 1
          %s626 = scalar_lea.sflag [#allocation5], %s625
          %s627 = sand.u32 %s76, 1
          %s628 = smul.addr %s627, 24
          %s629 = scalar_lea.vmem [#allocation8], %s628
          %630 = dma.done %s626, 384
        $region48: #{tpu_custom_call.1} parent=43 // pred_fallthru
          _
      $region44: #{tpu_custom_call.1} parent=5 // pred_fallthru
        _
    $region6: #{tpu_custom_call.1} parent=1 // loop_footer
      %s19 = sadd.s32 1, %s15
    $region7: #{tpu_custom_call.1} parent=1 // loop_footer_branch
      %14 = sbr.rel target = $region3
    $region8: #{tpu_custom_call.1} parent=1 // loop_exit
      _
    %631 = vsyncpa [#allocation4], 1
    %s632 = scalar_lea.sflag [#allocation4], 1
    %633 = vsyncpa %s632, 1
    %634 = vsyncpa [#allocation7], 1
    %s635 = scalar_lea.sflag [#allocation7], 1
    %636 = vsyncpa %s635, 1
    %637 = vsyncpa [#allocation5], 1
    %s638 = scalar_lea.sflag [#allocation5], 1
    %639 = vsyncpa %s638, 1

</llo_original>
